<compile_context>
chip_gen: v7x
topology: tpu7x:2x2x1
jax: 0.10.0
libtpu: 0.0.40
codegen_flags: <defaults>
</compile_context>

<pallas_src>
import math
import functools

import jax
import jax.numpy as jnp
from jax import lax
from jax.experimental import pallas as pl
from jax.experimental.pallas import tpu as pltpu

_MIB = 1024 * 1024


def _cdiv(a, b):
    return -(-a // b)


def _round_up(x, m):
    return ((x + m - 1) // m) * m


def _tpu_generation():
    """Best-effort TPU generation from device_kind; 0 if unknown."""
    try:
        kind = jax.devices()[0].device_kind.lower()
    except Exception:
        return 0
    for g in (7, 6, 5, 4):
        if ("v%d" % g) in kind:
            return g
    return 0


# ----------------------------------------------------------------------------- kernels

def _siren_kernel_direct(x_ref, w_ref, b_ref, o_ref, *, mxu_dtype):
    # x_ref: (TB, K)  input tile (original dtype; cast to MXU dtype here)
    # w_ref: (TN, K)  w0-scaled weight tile, PyTorch (dim_out, dim_in) layout
    # b_ref: (1, TN)  w0-scaled bias row (f32)
    # o_ref: (TB, TN) output tile
    xv = x_ref[...]
    if mxu_dtype is not None and xv.dtype != mxu_dtype:
        xv = xv.astype(mxu_dtype)                      # in-kernel cast: no extra HBM pass
    acc = lax.dot_general(
        xv, w_ref[...],
        dimension_numbers=(((1,), (1,)), ((), ())),    # x @ W^T, native on the MXU
        preferred_element_type=jnp.float32,
    )
    # f32 epilogue: bias add + sin (w0 already folded into W and b).
    o_ref[...] = jnp.sin(acc + b_ref[...]).astype(o_ref.dtype)


def _siren_kernel_acc(x_ref, w_ref, b_ref, o_ref, acc_ref, *, mxu_dtype):
    # K-tiled variant: grid axis 2 is the contraction ("arbitrary"), accumulator in VMEM.
    k = pl.program_id(2)

    @pl.when(k == 0)
    def _init():
        acc_ref[...] = jnp.zeros_like(acc_ref)

    xv = x_ref[...]
    if mxu_dtype is not None and xv.dtype != mxu_dtype:
        xv = xv.astype(mxu_dtype)
    acc_ref[...] += lax.dot_general(
        xv, w_ref[...],
        dimension_numbers=(((1,), (1,)), ((), ())),
        preferred_element_type=jnp.float32,
    )

    @pl.when(k == pl.num_programs(2) - 1)
    def _finalize():
        o_ref[...] = jnp.sin(acc_ref[...] + b_ref[...]).astype(o_ref.dtype)


# ----------------------------------------------------------------------------- tiling

def _choose_tiling(B, Din, Dout, x_itemsize, w_itemsize, out_itemsize, lane, num_tc):
    """Pick (tile_b, tile_n, tile_k, M, N, K, gm, gn, gk) minimising padding / restream."""
    # ---- K (contraction) : never padded unless very wide (then K-tiled) ----
    K_TILE_THRESHOLD = 4096
    if Din > K_TILE_THRESHOLD:
        tile_k = 2048                                   # multiple of 256 (v6e/v7x MXU) and 128
        K = _round_up(Din, tile_k)
    else:
        tile_k = Din                                    # full dim -> no HBM padding of x / W
        K = Din
    gk = K // tile_k

    # ---- N (Dout) : whole weight as one block when it fits a VMEM slab ----
    W_TILE_BYTES = 6 * _MIB
    if Dout * tile_k * w_itemsize <= W_TILE_BYTES:
        tile_n = Dout                                   # weight fetched from HBM exactly once
        N = Dout
    else:
        N = _round_up(Dout, lane)                       # minimal lane-aligned padding
        max_tile_n = max(lane, (W_TILE_BYTES // (tile_k * w_itemsize)) // lane * lane)
        tile_n = lane
        t = max_tile_n
        while t >= lane:                                # largest divisor of N (no over-padding)
            if N % t == 0:
                tile_n = t
                break
            t -= lane
    gn = N // tile_n

    # ---- B (batch) : derive tile count first, then tile size ----
    X_TILE_BYTES = 6 * _MIB
    OUT_TILE_BYTES = 4 * _MIB
    cap = 512                                           # amortizes ~0.35us/step overhead
    cap = min(cap, max(8, X_TILE_BYTES // (tile_k * x_itemsize)))
    cap = min(cap, max(8, OUT_TILE_BYTES // (tile_n * out_itemsize)))
    cap = max(8, (cap // 8) * 8)
    gm = _cdiv(B, cap)
    if num_tc > 1 and gm * gn < num_tc and B >= num_tc * 8:
        gm = num_tc                                     # give both v7x TensorCores work
    if gm == 1:
        tile_b = B                                      # full dim -> no batch padding
        M = B
    else:
        tile_b = _round_up(_cdiv(B, gm), 8)             # balanced tiles, <=7*gm pad rows
        M = tile_b * gm
    return tile_b, tile_n, tile_k, M, N, K, gm, gn, gk


# ----------------------------------------------------------------------------- forward

def siren_forward(x, weight, bias=None, *, w0=30.0, mxu_dtype=jnp.bfloat16, out_dtype=None):
    """x: (B, Din), weight: (Dout, Din) (PyTorch layout), bias: (Dout,) or None -> (B, Dout).

    Computes sin(w0 * (x @ W^T + b)).  Pass out_dtype=jnp.bfloat16 when chaining Siren
    layers to halve store traffic; mxu_dtype=None keeps the matmul in f32 (exact path
    for large w0 / first layers where bf16 phase error matters).
    """
    B, Din = x.shape
    Dout, Din_w = weight.shape
    assert Din_w == Din
    if out_dtype is None:
        out_dtype = x.dtype
    if bias is None:
        bias = jnp.zeros((Dout,), jnp.float32)

    gen = _tpu_generation()
    lane = 256 if gen >= 6 else 128                      # MXU width: 2x256^2 on v6e/v7x, 4x128^2 on v5e
    num_tc = 2 if gen >= 7 else 1                        # v7x: 2 TensorCores per chip

    x_itemsize = jnp.dtype(x.dtype).itemsize
    w_itemsize = jnp.dtype(mxu_dtype).itemsize if mxu_dtype is not None else 4
    out_itemsize = jnp.dtype(out_dtype).itemsize

    tile_b, tile_n, tile_k, M, N, K, gm, gn, gk = _choose_tiling(
        B, Din, Dout, x_itemsize, w_itemsize, out_itemsize, lane, num_tc)

    # ---- fold w0 into weight / bias (small arrays; drops a VPU mul per output elem) ----
    w_scaled = weight.astype(jnp.float32) * float(w0)
    if mxu_dtype is not None:
        w_scaled = w_scaled.astype(mxu_dtype)
    b_scaled = bias.astype(jnp.float32) * float(w0)

    # ---- pad only when actually needed (zero padding is exact for x @ W^T) ----
    xp = x if (M == B and K == Din) else jnp.pad(x, ((0, M - B), (0, K - Din)))
    wp = w_scaled if (N == Dout and K == Din) else jnp.pad(w_scaled, ((0, N - Dout), (0, K - Din)))
    bp = b_scaled if N == Dout else jnp.pad(b_scaled, (0, N - Dout))
    bp = bp.reshape(1, N)

    # ---- grid order: avoid restreaming the larger operand ----
    if gk == 1 and gn > 1 and gm > 1:
        extra_w = (gm - 1) * N * K * jnp.dtype(wp.dtype).itemsize   # batch-outer restreams W
        extra_x = (gn - 1) * M * K * jnp.dtype(xp.dtype).itemsize   # Dout-outer restreams x
        batch_outer = extra_w <= extra_x
    else:
        batch_outer = True

    if gk == 1:
        if batch_outer:
            grid = (gm, gn)
            x_map = lambda i, j: (i, 0)
            w_map = lambda i, j: (j, 0)
            b_map = lambda i, j: (0, j)
            o_map = lambda i, j: (i, j)
        else:
            grid = (gn, gm)
            x_map = lambda j, i: (i, 0)
            w_map = lambda j, i: (j, 0)
            b_map = lambda j, i: (0, j)
            o_map = lambda j, i: (i, j)
        sem = ("parallel", "parallel")
        scratch = []
        kernel = functools.partial(_siren_kernel_direct, mxu_dtype=mxu_dtype)
    else:
        grid = (gm, gn, gk)
        x_map = lambda i, j, k: (i, k)
        w_map = lambda i, j, k: (j, k)
        b_map = lambda i, j, k: (0, j)
        o_map = lambda i, j, k: (i, j)
        sem = ("parallel", "parallel", "arbitrary")
        scratch = [pltpu.VMEM((tile_b, tile_n), jnp.float32)]
        kernel = functools.partial(_siren_kernel_acc, mxu_dtype=mxu_dtype)

    # ---- VMEM limit from the actual tile footprint (+headroom), capped under v7x's 64 MiB ----
    x_tile_b = tile_b * tile_k * jnp.dtype(xp.dtype).itemsize
    w_tile_b = tile_n * tile_k * jnp.dtype(wp.dtype).itemsize
    o_tile_b = tile_b * tile_n * out_itemsize
    b_tile_b = tile_n * 4
    acc_b = tile_b * tile_n * 4 if gk > 1 else 0
    footprint = 2 * (x_tile_b + w_tile_b + b_tile_b + o_tile_b) + acc_b
    vmem_limit = int(min(48 * _MIB, max(32 * _MIB, footprint + 8 * _MIB)))

    # ---- honest cost estimate for the chosen grid order ----
    if gk > 1:
        x_passes, w_passes = gn, gm
    elif batch_outer:
        x_passes, w_passes = 1, (gm if gn > 1 else 1)
    else:
        x_passes, w_passes = (gn if gm > 1 else 1), 1
    cost = pl.CostEstimate(
        flops=2 * M * K * N,
        transcendentals=M * N,
        bytes_accessed=int(x_passes * M * K * jnp.dtype(xp.dtype).itemsize
                           + w_passes * N * K * jnp.dtype(wp.dtype).itemsize
                           + N * 4
                           + M * N * out_itemsize),
    )

    out = pl.pallas_call(
        kernel,
        out_shape=jax.ShapeDtypeStruct((M, N), out_dtype),
        grid_spec=pltpu.PrefetchScalarGridSpec(
            num_scalar_prefetch=0,
            grid=grid,
            in_specs=[
                pl.BlockSpec((tile_b, tile_k), x_map),    # x batch tile (cast in-kernel)
                pl.BlockSpec((tile_n, tile_k), w_map),    # w0-scaled weight tile (PyTorch layout)
                pl.BlockSpec((1, tile_n), b_map),         # w0-scaled bias row
            ],
            out_specs=pl.BlockSpec((tile_b, tile_n), o_map),
            scratch_shapes=scratch,
        ),
        compiler_params=pltpu.CompilerParams(
            dimension_semantics=sem,
            vmem_limit_bytes=vmem_limit,
        ),
        cost_estimate=cost,
    )(xp, wp, bp)

    if M == B and N == Dout:
        return out
    return out[:B, :Dout]


def init_siren_params(key, dim_in, dim_out, *, w0=30.0, c=6.0, is_first=False):
    """Deterministic Siren init matching the PyTorch module's init_()."""
    w_std = (1.0 / dim_in) if is_first else (math.sqrt(c / dim_in) / w0)
    kw, kb = jax.random.split(key)
    weight = jax.random.uniform(kw, (dim_out, dim_in), jnp.float32,
                                minval=-w_std, maxval=w_std)
    bias = jax.random.uniform(kb, (dim_out,), jnp.float32,
                              minval=-w_std, maxval=w_std)
    return weight, bias


if __name__ == "__main__":
    key = jax.random.PRNGKey(0)
    k_x, k_p = jax.random.split(key)

    batch, dim_in, dim_out = 8, 32, 64
    w0 = 30.0

    x = jax.random.normal(k_x, (batch, dim_in), jnp.float32)
    weight, bias = init_siren_params(k_p, dim_in, dim_out, w0=w0, c=6.0,
                                     is_first=False)

    out = siren_forward(x, weight, bias, w0=w0)
    out = jax.block_until_ready(out)
    assert out.shape == (batch, dim_out)
    assert out.dtype == x.dtype

    # Reference mirroring kernel numerics (w0 folded into W/b, bf16 MXU inputs, f32 accum/epilogue).
    xq = x.astype(jnp.bfloat16).astype(jnp.float32)
    wq = (weight * w0).astype(jnp.bfloat16).astype(jnp.float32)
    ref_q = jnp.sin(xq @ wq.T + w0 * bias)
    assert jnp.allclose(out, ref_q, atol=2e-3, rtol=2e-3), float(jnp.max(jnp.abs(out - ref_q)))

    # Pure-f32 module semantics: sin(w0 * (x @ W^T + b)); slack covers bf16 input rounding only.
    ref_f32 = jnp.sin(w0 * (x @ weight.T + bias))
    assert jnp.allclose(out, ref_f32, atol=5e-2), float(jnp.max(jnp.abs(out - ref_f32)))

    print("KERNEL_OK")
</pallas_src>

<mosaic_0001>
module attributes {stable_mosaic.version = 11 : i64} {
  func.func @_siren_kernel_direct(%arg0: i32, %arg1: i32, %arg2: memref<8x32xf32, #tpu.memory_space<vmem>>, %arg3: memref<64x32xbf16, #tpu.memory_space<vmem>>, %arg4: memref<1x64xf32, #tpu.memory_space<vmem>>, %arg5: memref<8x64xf32, #tpu.memory_space<vmem>>) attributes {dimension_semantics = [#tpu.dimension_semantics<parallel>, #tpu.dimension_semantics<parallel>], iteration_bounds = array<i64: 1, 1>, scalar_prefetch = 0 : i64, scratch_operands = 0 : i64, tpu.core_type = #tpu.core_type<tc>, window_params = [{transform_indices = @transform_0, window_bounds = array<i64: 8, 32>}, {transform_indices = @transform_1, window_bounds = array<i64: 64, 32>}, {transform_indices = @transform_2, window_bounds = array<i64: 1, 64>}, {transform_indices = @transform_3, window_bounds = array<i64: 8, 64>}]} {
    %c0 = arith.constant 0 : index
    %c0_0 = arith.constant 0 : index
    %0 = vector.load %arg2[%c0, %c0_0] : memref<8x32xf32, #tpu.memory_space<vmem>>, vector<8x32xf32>
    %1 = arith.truncf %0 : vector<8x32xf32> to vector<8x32xbf16>
    %c0_1 = arith.constant 0 : index
    %c0_2 = arith.constant 0 : index
    %2 = vector.load %arg3[%c0_1, %c0_2] : memref<64x32xbf16, #tpu.memory_space<vmem>>, vector<64x32xbf16>
    %cst = arith.constant dense<0.000000e+00> : vector<8x64xf32>
    %3 = tpu.matmul %1, %2, %cst {dimension_numbers = #tpu.dot_dimension_numbers<[1], [1], [0], [0], [0, 0, 1, 0], [], []>} : vector<8x32xbf16>, vector<64x32xbf16>, vector<8x64xf32> -> vector<8x64xf32>
    %c0_3 = arith.constant 0 : index
    %c0_4 = arith.constant 0 : index
    %4 = vector.load %arg4[%c0_3, %c0_4] : memref<1x64xf32, #tpu.memory_space<vmem>>, vector<1x64xf32>
    %5 = vector.broadcast %4 : vector<1x64xf32> to vector<8x64xf32>
    %6 = arith.addf %3, %5 : vector<8x64xf32>
    %7 = math.sin %6 : vector<8x64xf32>
    %c0_5 = arith.constant 0 : index
    %c0_6 = arith.constant 0 : index
    %8 = vector.load %arg5[%c0_5, %c0_6] : memref<8x64xf32, #tpu.memory_space<vmem>>, vector<8x64xf32>
    tpu.vector_store %arg5[%c0_5, %c0_6], %7 {strides = array<i32>} : memref<8x64xf32, #tpu.memory_space<vmem>>, vector<8x64xf32>,
    return
  }
  func.func @transform_0(%arg0: i32, %arg1: i32) -> (i32, i32) {
    %c0_i32 = arith.constant 0 : i32
    %c0_i32_0 = arith.constant 0 : i32
    return %arg0, %c0_i32 : i32, i32
  }
  func.func @transform_1(%arg0: i32, %arg1: i32) -> (i32, i32) {
    %c0_i32 = arith.constant 0 : i32
    %c0_i32_0 = arith.constant 0 : i32
    return %arg1, %c0_i32 : i32, i32
  }
  func.func @transform_2(%arg0: i32, %arg1: i32) -> (i32, i32) {
    %c0_i32 = arith.constant 0 : i32
    %c0_i32_0 = arith.constant 0 : i32
    return %c0_i32, %arg1 : i32, i32
  }
  func.func @transform_3(%arg0: i32, %arg1: i32) -> (i32, i32) {
    %c0_i32 = arith.constant 0 : i32
    return %arg0, %arg1 : i32, i32
  }
}

</mosaic_0001>

<llo_original>
// kernel: tpu_custom_call.1
$region0: #{tpu_custom_call.1}
  #allocation0 [shape = 'u32[]', space=smem, size = 0x4, offset = 0x4, fixed_abs, tag = 'smem constant byte address 0x4 - core index']
  #allocation1 [shape = 'u32[144,128]{1,0:T(1,128)}', space=vmem, size = 0x12000, scoped, tag = 'internal scratch']
  %s0 = inlined_call_operand.vmem [shape: f32[8,32], index: 0, kind: input, shape index: {}]
  %s1 = inlined_call_operand.vmem [shape: bf16[64,32], index: 1, kind: input, shape index: {}]
  %s2 = inlined_call_operand.vmem [shape: f32[1,64], index: 2, kind: input, shape index: {}]
  %s3 = inlined_call_operand.hbm [shape: f32[8,64], index: 3, kind: output, shape index: {}]
  %s4 = sld [smem:[#allocation0]]
  $region22: #{tpu_custom_call.1} parent=0
    _
  %s6 = ssub.s32 1, %s4
  %s7 = scalar_select 0, %s6, %s4
  $region1: #{tpu_custom_call.1} parent=0
    #allocation2 [shape = 'u8[4096]{0}', space=vmem, size = 0x1000, scoped, tag = 'output window, operand 0, single buffered']
    #allocation3 [shape = 's32[1]{0}', space=sflag, size = 0x4, scoped, tag = 'scoped memory for tpu_custom_call.1']
    %8 = vsyncpa [#allocation3], 0
    // Predicated region
    $region2: #{tpu_custom_call.1} parent=1 // pred_check
      _
    $region3: #{tpu_custom_call.1} parent=1 // pred_check_branch
      %10 = sbr.rel (0) target = $region5
    $region4: #{tpu_custom_call.1} parent=1 // pred_region
      _
    $region5: #{tpu_custom_call.1} parent=1 // pred_fallthru
      _
    // Predicated region
    $region6: #{tpu_custom_call.1} parent=1 // pred_check
      _
    $region7: #{tpu_custom_call.1} parent=1 // pred_check_branch
      %12 = sbr.rel (0) target = $region9
    $region8: #{tpu_custom_call.1} parent=1 // pred_region
      _
    $region9: #{tpu_custom_call.1} parent=1 // pred_fallthru
      _
    // Predicated region
    $region10: #{tpu_custom_call.1} parent=1 // pred_check
      _
    $region11: #{tpu_custom_call.1} parent=1 // pred_check_branch
      %14 = sbr.rel (0) target = $region13
    $region12: #{tpu_custom_call.1} parent=1 // pred_region
      _
    $region13: #{tpu_custom_call.1} parent=1 // pred_fallthru
      _
    %v16 = vld [vmem:[%s0] sm:$0xff]
    %v17 = vpack.c.bf16 %v16, %v16
    %v18 = vld [vmem:[%s1] sm:$0xf]
    %v19 = vld [vmem:[%s1 + $0x4] sm:$0xf]
    %v20 = vld [vmem:[%s1 + $0x8] sm:$0xf]
    %v21 = vld [vmem:[%s1 + $0xc] sm:$0xf]
    %v22 = vld [vmem:[%s1 + $0x10] sm:$0xf]
    %v23 = vld [vmem:[%s1 + $0x14] sm:$0xf]
    %v24 = vld [vmem:[%s1 + $0x18] sm:$0xf]
    %v25 = vld [vmem:[%s1 + $0x1c] sm:$0xf]
    %v26 = vld [vmem:[%s2] sm:$0x1]
    %v28 = vlaneseq
    %v29 = vshrl.u32 %v28, 7
    %v30 = vsub.s32 0, %v29
    %v31 = vrot.slane %v26, %v30
    %v41 = vunpack.c.l.b16 %v18
    %v42 = vunpack.c.l.b16 %v19
    %v43 = vunpack.c.l.b16 %v20
    %v44 = vunpack.c.l.b16 %v21
    %v45 = vunpack.c.l.b16 %v22
    %v46 = vunpack.c.l.b16 %v23
    %v47 = vunpack.c.l.b16 %v24
    %v48 = vunpack.c.l.b16 %v25
    %v49 = vpack.c.b16 %v42, %v41
    %v50 = vpack.c.b16 %v44, %v43
    %v51 = vpack.c.b16 %v46, %v45
    %v52 = vpack.c.b16 %v48, %v47
    %vm53 = vcmask 261120
    %v55 = vsel %vm53, %v17, 0
    %v58 = vsel %vm53, %v49, 0
    %v61 = vsel %vm53, %v50, 0
    %v64 = vsel %vm53, %v51, 0
    %v67 = vsel %vm53, %v52, 0
    %69 = vmatprep.subr.bf16.mxu0 0
    %70 = vmatpush1.bf16.xpose.msra.mxu0 %v58
    %71 = vmatprep.subr.bf16.mxu0 0
    %72 = vmatpush1.bf16.xpose.msra.mxu0 %v61
    %73 = vmatprep.subr.bf16.mxu0 0
    %74 = vmatpush1.bf16.xpose.msra.mxu0 %v64
    %75 = vmatprep.subr.bf16.mxu0 0
    %76 = vmatpush1.bf16.xpose.msra.mxu0 %v67
    %77 = vmatprep.subr.bf16.mxu0 0
    %78 = vmatpush1.bf16.xpose.msra.mxu0 0
    %79 = vmatprep.subr.bf16.mxu0 0
    %80 = vmatpush1.bf16.xpose.msra.mxu0 0
    %81 = vmatprep.subr.bf16.mxu0 0
    %82 = vmatpush1.bf16.xpose.msra.mxu0 0
    %83 = vmatprep.subr.bf16.mxu0 0
    %84 = vmatpush1.bf16.xpose.msra.mxu0 0
    %85 = vmatprep.subr.bf16.mxu0 0
    %86 = vmatpush1.bf16.xpose.msra.mxu0 0
    %87 = vmatprep.subr.bf16.mxu0 0
    %88 = vmatpush1.bf16.xpose.msra.mxu0 0
    %89 = vmatprep.subr.bf16.mxu0 0
    %90 = vmatpush1.bf16.xpose.msra.mxu0 0
    %91 = vmatprep.subr.bf16.mxu0 0
    %92 = vmatpush1.bf16.xpose.msra.mxu0 0
    %93 = vmatprep.subr.bf16.mxu0 0
    %94 = vmatpush1.bf16.xpose.msra.mxu0 0
    %95 = vmatprep.subr.bf16.mxu0 0
    %96 = vmatpush1.bf16.xpose.msra.mxu0 0
    %97 = vmatprep.subr.bf16.mxu0 0
    %98 = vmatpush1.bf16.xpose.msra.mxu0 0
    %99 = vmatprep.subr.bf16.mxu0 0
    %100 = vmatpush1.bf16.xpose.msra.mxu0 0
    %101 = vmatprep.mubr.bf16.mxu0 0
    %102 = vmatmul.mubr.bf16.gmra.mrb[0].mxu0 %v55
    %v103 = vpop.f32.mrb[0].mxu0
    %v104 = vadd.f32 %v31, %v103
    %v105 = vpop.f32.mrb[0].mxu0
    %v106 = vpop.f32.mrb[0].mxu0
    %v107 = vpop.f32.mrb[0].mxu0
    %108 = vdwg.mxu0
    %v109 = vand.u32 2147483647, %v104
    %vm110 = vcmp.le.f32.partialorder %v109, 0.7853982
    %vm111 = vcmp.lt.s32.totalorder %v104, 0
    %v112 = vand.u32 %v104, 2139095040
    %v113 = vshrl.u32 %v112, 23
    %v114 = vsub.s32 %v113, 127
    %v115 = vand.u32 2147483647, %v104
    %v116 = vand.u32 %v115, 8388607
    %v117 = vor.u32 %v116, 8388608
    %v118 = vsub.s32 0, %v117
    %v119 = vadd.s32 %v114, 1
    %vm120 = vcmp.gt.s32.totalorder %v119, 0
    %v121 = vsel %vm120, %v119, 0
    %v122 = vshrl.u32 %v121, 5
    %v123 = vand.u32 %v121, 31
    %v124 = vsub.s32 32, %v123
    %v125 = vshrl.u32 683565275, %v124
    %v126 = vshll.u32 683565275, %v123
    %v127 = vshrl.u32 2475754826, %v124
    %v128 = vor.u32 %v126, %v127
    %v129 = vshll.u32 2475754826, %v123
    %v130 = vshrl.u32 2131351028, %v124
    %v131 = vor.u32 %v129, %v130
    %v132 = vshll.u32 2131351028, %v123
    %v133 = vshrl.u32 2102212464, %v124
    %v134 = vor.u32 %v132, %v133
    %v135 = vshll.u32 2102212464, %v123
    %v136 = vshrl.u32 920167782, %v124
    %v137 = vor.u32 %v135, %v136
    %v138 = vshll.u32 920167782, %v123
    %v139 = vshrl.u32 1326507024, %v124
    %v140 = vor.u32 %v138, %v139
    %vm141 = vcmp.lt.s32.totalorder %v122, 1
    %vm142 = vcmp.lt.s32.totalorder %v122, 2
    %vm143 = vcmp.lt.s32.totalorder %v122, 3
    %vm144 = vcmp.lt.s32.totalorder %v122, 4
    %v145 = vsel %vm141, %v125, %v128
    %v146 = vsel %vm144, %v134, 2102212464
    %v147 = vsel %vm143, %v131, %v146
    %v148 = vsel %vm142, %v145, %v147
    %v149 = vsel %vm141, %v128, %v131
    %v150 = vsel %vm144, %v137, 920167782
    %v151 = vsel %vm143, %v134, %v150
    %v152 = vsel %vm142, %v149, %v151
    %v153 = vsel %vm141, %v131, %v134
    %v154 = vsel %vm144, %v140, 1326507024
    %v155 = vsel %vm143, %v137, %v154
    %v156 = vsel %vm142, %v153, %v155
    %v157 = vshll.u32 %v117, 8
    %v158 = vmul.u32.u64.compose %v157, %v156
    %v159 = vextract.low.u32 %v158
    %v160 = vextract.high.u32 %v158
    %v161 = vmul.u32.u64.compose %v157, %v152
    %v162 = vextract.low.u32 %v161
    %v163 = vextract.high.u32 %v161
    %v164 = vmul.u32 %v157, %v148
    %v165 = vadd.s32 %v160, %v162
    %vm166 = vc.u32 %v160, %v162
    %v167 = vadd.s32 %v163, 1
    %v168 = vsel %vm166, %v167, %v163
    %v169 = vadd.s32 %v164, %v168
    %v170 = vadd.s32 %v169, 536870912
    %v171 = vshrl.u32 %v170, 30
    %v172 = vshll.u32 %v171, 30
    %v173 = vsub.s32 %v169, %v172
    %vm174 = vcmp.lt.s32.totalorder %v173, 0
    %v175 = vsub.s32 0, %v173
    %v176 = vsel %vm174, %v175, %v173
    %v177 = vclz %v176
    %v178 = vsub.s32 %v177, 2
    %vm179 = vcmp.gt.s32.totalorder 0, %v178
    %v180 = vsel %vm179, 0, %v178
    %v181 = vsub.s32 32, %v180
    %v182 = vshll.u32 %v173, %v180
    %v183 = vshrl.u32 %v165, %v181
    %v184 = vor.u32 %v182, %v183
    %v185 = vsub.s32 4294967266, %v180
    %v186 = vadd.s32 %v185, 127
    %v187 = vshll.u32 %v186, 23
    %v188 = vor.u32 4788187, %v187
    %v189 = vand.u32 2147483647, %v188
    %v191 = vcvt.s32.f32 %v184
    %v192 = vmul.f32 %v191, %v189
    %v193 = vxor.u32 %v192, 2147483648
    %v194 = vsel %vm111, %v193, %v192
    %v195 = vsub.s32 4, %v171
    %v196 = vsel %vm111, %v195, %v171
    %v197 = vsel %vm110, %v104, %v194
    %v198 = vsel %vm110, 0, %v196
    %v199 = vcosq.f32.pop %v197
    %v200 = vsinq.f32.pop %v197
    %vm201 = vweird.f32 %v104
    %v202 = vadd.s32 %v198, 3
    %v203 = vand.u32 %v202, 3
    %vm204 = vcmp.lt.s32.totalorder %v203, 2
    %vm205 = vcmp.eq.s32.totalorder %v203, 0
    %v206 = vxor.u32 %v200, 2147483648
    %v207 = vsel %vm205, %v199, %v206
    %vm208 = vcmp.eq.s32.totalorder %v203, 2
    %v209 = vxor.u32 %v199, 2147483648
    %v210 = vsel %vm208, %v209, %v200
    %v211 = vsel %vm204, %v207, %v210
    %v212 = vsel %vm201, nan, %v211
    %vm213 = vcmask 523264
    %214 = vst.msk [vmem:[#allocation2] sm:$0xff] %vm213, %v212
    // Predicated region
    $region14: #{tpu_custom_call.1} parent=1 // pred_check
      _
    $region15: #{tpu_custom_call.1} parent=1 // pred_check_branch
      %216 = sbr.rel (0) target = $region17
    $region16: #{tpu_custom_call.1} parent=1 // pred_region
      %s218 = ssub.s32 128, 128
      %219 = vsyncadd [#allocation3], %s218
      %s221 = sshll.u32 [#allocation2], 4
      %s222 = int_to_ptr.vmem [resolvable:$true] %s221
      %224 = dma.vmem_to_hbm [thread:$0]  %s222, 128, %s3, [#allocation3]
    $region17: #{tpu_custom_call.1} parent=1 // pred_fallthru
      _
    // Predicated region
    $region18: #{tpu_custom_call.1} parent=1 // pred_check
      _
    $region19: #{tpu_custom_call.1} parent=1 // pred_check_branch
      %226 = sbr.rel (0) target = $region21
    $region20: #{tpu_custom_call.1} parent=1 // pred_region
      %227 = dma.done [#allocation3], 128
    $region21: #{tpu_custom_call.1} parent=1 // pred_fallthru
      _
    %228 = vsyncpa [#allocation3], 1

</llo_original>
